<compile_context>
chip_gen: v5e
topology: v5e:2x2
jax: 0.10.0
libtpu: 0.0.40
codegen_flags: <defaults>
</compile_context>

<pallas_src>
import jax
import jax.numpy as jnp
from jax.experimental import pallas as pl
from jax.experimental.pallas import tpu as pltpu


def _round_up(x: int, m: int) -> int:
    return ((x + m - 1) // m) * m


def _largest_divisor_tile(padded: int, granule: int, cap: int) -> int:
    """Largest multiple of `granule` that divides `padded` and is <= cap."""
    m = padded // granule
    best = 1
    d = 1
    while d * d <= m:
        if m % d == 0:
            for cand in (d, m // d):
                if granule * cand <= cap and cand > best:
                    best = cand
        d += 1
    return granule * best


def _choose_tiles(Mp: int, Np: int, Kp: int):
    """Tiles that divide the padded dims exactly (no tile-granularity padding).

    Caps: tm,tn <= 512, tk <= 1024.  bf16 operands: live footprint at max
    config (512/512/1024) is ~7 MiB (2x x-tile + 2x w-tile + 2x f32 out-tile
    + f32 acc), comfortably inside scoped VMEM on v5e/v6e/v7x.
    tm is kept a multiple of 16 (bf16 sublane minimum), tn/tk multiples of 128.
    """
    tm = _largest_divisor_tile(Mp, 16, 512)
    tn = _largest_divisor_tile(Np, 128, 512)
    tk = _largest_divisor_tile(Kp, 128, 1024)

    # Megacore (v7x: 2 TCs): make sure the "parallel" axes have >= 2 steps
    # when the problem allows it, so one core isn't left idle.
    while (Mp // tm) * (Np // tn) < 2:
        if tn >= 256:
            tn //= 2
        elif tm >= 32:
            tm //= 2
        else:
            break
    return tm, tn, tk


def _fc_mish_kernel(x_ref, w_ref, b_ref, o_ref, acc_ref):
    """One (i, j, k) grid step of  o = mish(x @ W + b), W already (K, N).

    x_ref:   (tm, tk) bf16 input tile
    w_ref:   (tk, tn) bf16 weight tile (pre-transposed; standard contraction)
    b_ref:   (1,  tn) f32 bias tile
    o_ref:   (tm, tn) output tile (written once, at k == last)
    acc_ref: (tm, tn) f32 accumulator scratch (persists across the K axis)
    """
    k = pl.program_id(2)

    @pl.when(k == 0)
    def _():
        acc_ref[...] = jnp.zeros_like(acc_ref)

    acc_ref[...] += jnp.dot(x_ref[...], w_ref[...],
                            preferred_element_type=jnp.float32)

    @pl.when(k == pl.num_programs(2) - 1)
    def _():
        z = acc_ref[...] + b_ref[...]
        # mish(z) = z * tanh(softplus(z)) = z * e(e+2) / (e(e+2) + 2), e = exp(z).
        # Clamp before exp: for z >= 20 the factor is exactly 1.0 in f32, so no
        # extra select is needed.
        e = jnp.exp(jnp.minimum(z, 20.0))
        num = e * (e + 2.0)
        t = num * pl.reciprocal(num + 2.0, approx=True)
        o_ref[...] = (z * t).astype(o_ref.dtype)


@jax.jit
def fc_layer_forward(x, weight, bias):
    """
    x:      (batch, input_dim)          f32
    weight: (output_dim, input_dim)     f32, PyTorch nn.Linear convention
    bias:   (output_dim,)               f32
    returns (batch, output_dim)         f32

    Equivalent to eval-mode FCLayer(active_type='mish'):  mish(x @ W^T + b).
    The matmul runs with bf16 operands and f32 accumulation.
    """
    M, K = x.shape
    N = weight.shape[0]

    # Padding granularity (independent of tile size): M->16 (bf16 sublane min),
    # K/N->128 (lane).  Zero K-padding contributes 0 to the dot product; padded
    # M/N rows/cols are sliced off below.
    Mp, Np, Kp = _round_up(M, 16), _round_up(N, 128), _round_up(K, 128)
    tm, tn, tk = _choose_tiles(Mp, Np, Kp)

    # bf16 operands for the MXU; one-time (K, N) weight transpose in HBM so the
    # kernel never swaps the weight tile's lane axis.
    x_b = x.astype(jnp.bfloat16)
    w_t = weight.T.astype(jnp.bfloat16)            # (K, N)
    x_p = x_b if (Mp == M and Kp == K) else jnp.pad(x_b, ((0, Mp - M), (0, Kp - K)))
    w_p = w_t if (Kp == K and Np == N) else jnp.pad(w_t, ((0, Kp - K), (0, Np - N)))
    b_p = bias.astype(jnp.float32)
    if Np != N:
        b_p = jnp.pad(b_p, (0, Np - N))
    b2 = b_p.reshape(1, Np)

    cost = pl.CostEstimate(
        flops=2 * Mp * Np * Kp,
        transcendentals=Mp * Np,
        bytes_accessed=(Mp * Kp * 2 + Kp * Np * 2 + Np * 4 + Mp * Np * 4),
    )

    out_p = pl.pallas_call(
        _fc_mish_kernel,
        out_shape=jax.ShapeDtypeStruct((Mp, Np), jnp.float32),
        grid_spec=pltpu.PrefetchScalarGridSpec(
            num_scalar_prefetch=0,
            grid=(Mp // tm, Np // tn, Kp // tk),           # K (reduction) last
            in_specs=[
                pl.BlockSpec((tm, tk), lambda i, j, k: (i, k)),   # x  (M, K)
                pl.BlockSpec((tk, tn), lambda i, j, k: (k, j)),   # W^T (K, N)
                pl.BlockSpec((1, tn), lambda i, j, k: (0, j)),    # bias
            ],
            out_specs=pl.BlockSpec((tm, tn), lambda i, j, k: (i, j)),
            scratch_shapes=[pltpu.VMEM((tm, tn), jnp.float32)],
        ),
        compiler_params=pltpu.CompilerParams(
            dimension_semantics=("parallel", "parallel", "arbitrary"),
            vmem_limit_bytes=48 * 1024 * 1024,
        ),
        cost_estimate=cost,
    )(x_p, w_p, b2)

    return out_p[:M, :N]


def _init_linear_params(key, input_dim, output_dim):
    """Deterministic init mimicking PyTorch nn.Linear default (uniform +/- 1/sqrt(in))."""
    kw, kb = jax.random.split(key)
    bound = 1.0 / jnp.sqrt(float(input_dim))
    weight = jax.random.uniform(kw, (output_dim, input_dim),
                                minval=-bound, maxval=bound, dtype=jnp.float32)
    bias = jax.random.uniform(kb, (output_dim,),
                              minval=-bound, maxval=bound, dtype=jnp.float32)
    return weight, bias


def _reference_bf16(x, weight, bias):
    """Reference with the same bf16 operand rounding the kernel uses."""
    xq = x.astype(jnp.bfloat16).astype(jnp.float32)
    wq = weight.astype(jnp.bfloat16).astype(jnp.float32)
    z = xq @ wq.T + bias
    return z * jnp.tanh(jax.nn.softplus(z))


def _reference_f32(x, weight, bias):
    z = x @ weight.T + bias
    return z * jnp.tanh(jax.nn.softplus(z))


if __name__ == "__main__":
    key = jax.random.PRNGKey(0)
    k_x, k_p, k_x2, k_p2 = jax.random.split(key, 4)

    # Small case: single (16,128)-class tile, grid (1,1,1).
    batch, input_dim, output_dim = 8, 32, 16
    x = jax.random.normal(k_x, (batch, input_dim), dtype=jnp.float32)
    weight, bias = _init_linear_params(k_p, input_dim, output_dim)

    out = fc_layer_forward(x, weight, bias)
    jax.block_until_ready(out)
    ref = _reference_bf16(x, weight, bias)
    assert out.shape == ref.shape
    assert jnp.allclose(out, ref, atol=5e-3, rtol=5e-3), "mismatch vs bf16 reference (small)"
    # Loose check against full-f32 PyTorch semantics (bf16 operand rounding).
    assert jnp.allclose(out, _reference_f32(x, weight, bias), atol=3e-2, rtol=3e-2), \
        "mismatch vs f32 reference (small)"

    # Second case: multiple K tiles (accumulator + finalize path), M/N/K padding,
    # and the megacore tn-split (grid becomes (1, 2, 2)).
    batch2, input_dim2, output_dim2 = 24, 1280, 200
    x2 = jax.random.normal(k_x2, (batch2, input_dim2), dtype=jnp.float32)
    weight2, bias2 = _init_linear_params(k_p2, input_dim2, output_dim2)

    out2 = fc_layer_forward(x2, weight2, bias2)
    jax.block_until_ready(out2)
    ref2 = _reference_bf16(x2, weight2, bias2)
    assert out2.shape == ref2.shape
    assert jnp.allclose(out2, ref2, atol=5e-3, rtol=5e-3), "mismatch vs bf16 reference (tiled)"
    assert jnp.allclose(out2, _reference_f32(x2, weight2, bias2), atol=3e-2, rtol=3e-2), \
        "mismatch vs f32 reference (tiled)"

    print("KERNEL_OK")
</pallas_src>

<mosaic_0001>
module attributes {stable_mosaic.version = 11 : i64} {
  func.func @_fc_mish_kernel(%arg0: i32, %arg1: i32, %arg2: i32, %arg3: memref<16x128xbf16, #tpu.memory_space<vmem>>, %arg4: memref<128x128xbf16, #tpu.memory_space<vmem>>, %arg5: memref<1x128xf32, #tpu.memory_space<vmem>>, %arg6: memref<16x128xf32, #tpu.memory_space<vmem>>, %arg7: memref<16x128xf32, #tpu.memory_space<vmem>>) attributes {dimension_semantics = [#tpu.dimension_semantics<parallel>, #tpu.dimension_semantics<parallel>, #tpu.dimension_semantics<arbitrary>], iteration_bounds = array<i64: 1, 1, 1>, scalar_prefetch = 0 : i64, scratch_operands = 1 : i64, tpu.core_type = #tpu.core_type<tc>, window_params = [{transform_indices = @transform_0, window_bounds = array<i64: 16, 128>}, {transform_indices = @transform_1, window_bounds = array<i64: 128, 128>}, {transform_indices = @transform_2, window_bounds = array<i64: 1, 128>}, {transform_indices = @transform_3, window_bounds = array<i64: 16, 128>}]} {
    %c0_i32 = arith.constant 0 : i32
    %0 = arith.cmpi eq, %arg2, %c0_i32 : i32
    %1 = arith.extui %0 : i1 to i32
    %c0_i32_0 = arith.constant 0 : i32
    %2 = arith.cmpi ne, %1, %c0_i32_0 : i32
    scf.if %2 {
      %cst_10 = arith.constant 0.000000e+00 : f32
      %12 = vector.broadcast %cst_10 : f32 to vector<16x128xf32>
      %c0_11 = arith.constant 0 : index
      %c0_12 = arith.constant 0 : index
      %13 = vector.load %arg7[%c0_11, %c0_12] : memref<16x128xf32, #tpu.memory_space<vmem>>, vector<16x128xf32>
      tpu.vector_store %arg7[%c0_11, %c0_12], %12 {strides = array<i32>} : memref<16x128xf32, #tpu.memory_space<vmem>>, vector<16x128xf32>,
    } else {
    }
    %c0 = arith.constant 0 : index
    %c0_1 = arith.constant 0 : index
    %3 = vector.load %arg7[%c0, %c0_1] : memref<16x128xf32, #tpu.memory_space<vmem>>, vector<16x128xf32>
    %c0_2 = arith.constant 0 : index
    %c0_3 = arith.constant 0 : index
    %4 = vector.load %arg3[%c0_2, %c0_3] : memref<16x128xbf16, #tpu.memory_space<vmem>>, vector<16x128xbf16>
    %c0_4 = arith.constant 0 : index
    %c0_5 = arith.constant 0 : index
    %5 = vector.load %arg4[%c0_4, %c0_5] : memref<128x128xbf16, #tpu.memory_space<vmem>>, vector<128x128xbf16>
    %cst = arith.constant dense<0.000000e+00> : vector<16x128xf32>
    %6 = tpu.matmul %4, %5, %cst {dimension_numbers = #tpu.dot_dimension_numbers<[1], [0], [0], [1], [0, 0, 1, 1], [], []>} : vector<16x128xbf16>, vector<128x128xbf16>, vector<16x128xf32> -> vector<16x128xf32>
    %7 = arith.addf %3, %6 : vector<16x128xf32>
    %c0_6 = arith.constant 0 : index
    %c0_7 = arith.constant 0 : index
    %8 = vector.load %arg7[%c0_6, %c0_7] : memref<16x128xf32, #tpu.memory_space<vmem>>, vector<16x128xf32>
    tpu.vector_store %arg7[%c0_6, %c0_7], %7 {strides = array<i32>} : memref<16x128xf32, #tpu.memory_space<vmem>>, vector<16x128xf32>,
    %c0_i32_8 = arith.constant 0 : i32
    %9 = arith.cmpi eq, %arg2, %c0_i32_8 : i32
    %10 = arith.extui %9 : i1 to i32
    %c0_i32_9 = arith.constant 0 : i32
    %11 = arith.cmpi ne, %10, %c0_i32_9 : i32
    scf.if %11 {
      %c0_10 = arith.constant 0 : index
      %c0_11 = arith.constant 0 : index
      %12 = vector.load %arg7[%c0_10, %c0_11] : memref<16x128xf32, #tpu.memory_space<vmem>>, vector<16x128xf32>
      %c0_12 = arith.constant 0 : index
      %c0_13 = arith.constant 0 : index
      %13 = vector.load %arg5[%c0_12, %c0_13] : memref<1x128xf32, #tpu.memory_space<vmem>>, vector<1x128xf32>
      %14 = vector.broadcast %13 : vector<1x128xf32> to vector<16x128xf32>
      %15 = arith.addf %12, %14 : vector<16x128xf32>
      %cst_14 = arith.constant 2.000000e+01 : f32
      %16 = vector.broadcast %cst_14 : f32 to vector<16x128xf32>
      %17 = arith.minimumf %15, %16 : vector<16x128xf32>
      %18 = math.exp %17 : vector<16x128xf32>
      %cst_15 = arith.constant 2.000000e+00 : f32
      %19 = vector.broadcast %cst_15 : f32 to vector<16x128xf32>
      %20 = arith.addf %18, %19 : vector<16x128xf32>
      %21 = arith.mulf %18, %20 : vector<16x128xf32>
      %cst_16 = arith.constant 2.000000e+00 : f32
      %22 = vector.broadcast %cst_16 : f32 to vector<16x128xf32>
      %23 = arith.addf %21, %22 : vector<16x128xf32>
      %24 = tpu.reciprocal %23 {approx = true} : vector<16x128xf32> -> vector<16x128xf32>
      %25 = arith.mulf %21, %24 : vector<16x128xf32>
      %26 = arith.mulf %15, %25 : vector<16x128xf32>
      %c0_17 = arith.constant 0 : index
      %c0_18 = arith.constant 0 : index
      %27 = vector.load %arg6[%c0_17, %c0_18] : memref<16x128xf32, #tpu.memory_space<vmem>>, vector<16x128xf32>
      tpu.vector_store %arg6[%c0_17, %c0_18], %26 {strides = array<i32>} : memref<16x128xf32, #tpu.memory_space<vmem>>, vector<16x128xf32>,
    } else {
    }
    return
  }
  func.func @transform_0(%arg0: i32, %arg1: i32, %arg2: i32) -> (i32, i32) {
    %c0_i32 = arith.constant 0 : i32
    return %arg0, %arg2 : i32, i32
  }
  func.func @transform_1(%arg0: i32, %arg1: i32, %arg2: i32) -> (i32, i32) {
    %c0_i32 = arith.constant 0 : i32
    return %arg2, %arg1 : i32, i32
  }
  func.func @transform_2(%arg0: i32, %arg1: i32, %arg2: i32) -> (i32, i32) {
    %c0_i32 = arith.constant 0 : i32
    %c0_i32_0 = arith.constant 0 : i32
    return %c0_i32, %arg1 : i32, i32
  }
  func.func @transform_3(%arg0: i32, %arg1: i32, %arg2: i32) -> (i32, i32) {
    %c0_i32 = arith.constant 0 : i32
    return %arg0, %arg1 : i32, i32
  }
}

</mosaic_0001>

<llo_original>
// kernel: fc_layer_forward.1
$region0: #{fc_layer_forward.1}
  #allocation0 [shape = 'u32[]', space=smem, size = 0x4, offset = 0x4, fixed_abs, tag = 'smem constant byte address 0x4 - core index']
  #allocation1 [shape = 'u32[72,128]{1,0:T(1,128)}', space=vmem, size = 0x9000, scoped, tag = 'internal scratch']
  #allocation2 [shape = 'f32[16,128]{1,0:T(8,128)}', space=vmem, size = 0x2000, scoped, tag = 'scratch operand']
  %s0 = inlined_call_operand.vmem [shape: bf16[16,128], index: 0, kind: input, shape index: {}]
  %s1 = inlined_call_operand.vmem [shape: bf16[128,128], index: 1, kind: input, shape index: {}]
  %s2 = inlined_call_operand.vmem [shape: f32[1,128], index: 2, kind: input, shape index: {}]
  %s3 = inlined_call_operand.vmem [shape: f32[16,128], index: 3, kind: output, shape index: {}]
  %s4 = sld [smem:[#allocation0]]
  $region30: #{fc_layer_forward.1} parent=0
    _
  %s6 = ssub.s32 1, %s4
  %s7 = scalar_select 0, %s6, %s4
  // Predicated region
  $region2: #{fc_layer_forward.1} parent=0 // pred_check
    _
  $region3: #{fc_layer_forward.1} parent=0 // pred_check_branch
    %9 = sbr.rel (0) target = $region5
  $region4: #{fc_layer_forward.1} parent=0 // pred_region
    _
  $region5: #{fc_layer_forward.1} parent=0 // pred_fallthru
    _
  // Predicated region
  $region6: #{fc_layer_forward.1} parent=0 // pred_check
    _
  $region7: #{fc_layer_forward.1} parent=0 // pred_check_branch
    %11 = sbr.rel (0) target = $region9
  $region8: #{fc_layer_forward.1} parent=0 // pred_region
    _
  $region9: #{fc_layer_forward.1} parent=0 // pred_fallthru
    _
  // Predicated region
  $region10: #{fc_layer_forward.1} parent=0 // pred_check
    _
  $region11: #{fc_layer_forward.1} parent=0 // pred_check_branch
    %13 = sbr.rel (0) target = $region13
  $region12: #{fc_layer_forward.1} parent=0 // pred_region
    _
  $region13: #{fc_layer_forward.1} parent=0 // pred_fallthru
    _
  %p14 = scmp.eq.s32.totalorder 0, 0
  // Predicated region
  $region14: #{fc_layer_forward.1} parent=0 // pred_check
    %p15 = pneg %p14
  $region15: #{fc_layer_forward.1} parent=0 // pred_check_branch
    %17 = sbr.rel (%p15) target = $region17
  $region16: #{fc_layer_forward.1} parent=0 // pred_region
    %18 = vst [vmem:[#allocation2] sm:$0xff] 0.0
    %19 = vst [vmem:[#allocation2 + $0x8] sm:$0xff] 0.0
  $region17: #{fc_layer_forward.1} parent=0 // pred_fallthru
    _
  %v20 = vld [vmem:[#allocation2] sm:$0xff]
  %v21 = vld [vmem:[#allocation2 + $0x8] sm:$0xff]
  %v22 = vld [vmem:[%s0] sm:$0xf]
  %v23 = vld [vmem:[%s0 + $0x4] sm:$0xf]
  %v24 = vld [vmem:[%s1] sm:$0xf]
  %v25 = vld [vmem:[%s1 + $0x4] sm:$0xf]
  %v26 = vld [vmem:[%s1 + $0x8] sm:$0xf]
  %v27 = vld [vmem:[%s1 + $0xc] sm:$0xf]
  %v28 = vld [vmem:[%s1 + $0x10] sm:$0xf]
  %v29 = vld [vmem:[%s1 + $0x14] sm:$0xf]
  %v30 = vld [vmem:[%s1 + $0x18] sm:$0xf]
  %v31 = vld [vmem:[%s1 + $0x1c] sm:$0xf]
  %v32 = vld [vmem:[%s1 + $0x20] sm:$0xf]
  %v33 = vld [vmem:[%s1 + $0x24] sm:$0xf]
  %v34 = vld [vmem:[%s1 + $0x28] sm:$0xf]
  %v35 = vld [vmem:[%s1 + $0x2c] sm:$0xf]
  %v36 = vld [vmem:[%s1 + $0x30] sm:$0xf]
  %v37 = vld [vmem:[%s1 + $0x34] sm:$0xf]
  %v38 = vld [vmem:[%s1 + $0x38] sm:$0xf]
  %v39 = vld [vmem:[%s1 + $0x3c] sm:$0xf]
  %v42 = vunpack.c.l.b16 %v22
  %v43 = vunpack.c.l.b16 %v23
  %v44 = vpack.c.b16 %v43, %v42
  %v62 = vunpack.c.l.b16 %v24
  %v63 = vunpack.c.l.b16 %v25
  %v64 = vunpack.c.l.b16 %v26
  %v65 = vunpack.c.l.b16 %v27
  %v66 = vunpack.c.l.b16 %v28
  %v67 = vunpack.c.l.b16 %v29
  %v68 = vunpack.c.l.b16 %v30
  %v69 = vunpack.c.l.b16 %v31
  %v70 = vunpack.c.l.b16 %v32
  %v71 = vunpack.c.l.b16 %v33
  %v72 = vunpack.c.l.b16 %v34
  %v73 = vunpack.c.l.b16 %v35
  %v74 = vunpack.c.l.b16 %v36
  %v75 = vunpack.c.l.b16 %v37
  %v76 = vunpack.c.l.b16 %v38
  %v77 = vunpack.c.l.b16 %v39
  %v78 = vpack.c.b16 %v63, %v62
  %v79 = vpack.c.b16 %v65, %v64
  %v80 = vpack.c.b16 %v67, %v66
  %v81 = vpack.c.b16 %v69, %v68
  %v82 = vpack.c.b16 %v71, %v70
  %v83 = vpack.c.b16 %v73, %v72
  %v84 = vpack.c.b16 %v75, %v74
  %v85 = vpack.c.b16 %v77, %v76
  %94 = vmatpush.bf16.msra.mxu0 %v85
  %95 = vmatpush.bf16.msra.mxu0 %v84
  %96 = vmatpush.bf16.msra.mxu0 %v83
  %97 = vmatpush.bf16.msra.mxu0 %v82
  %98 = vmatpush.bf16.msra.mxu0 %v81
  %99 = vmatpush.bf16.msra.mxu0 %v80
  %100 = vmatpush.bf16.msra.mxu0 %v79
  %101 = vmatpush.bf16.msra.mxu0 %v78
  %102 = vmatmul.bf16.gmra.mxu0 %v44
  %v103 = vpop.f32.mrf.mxu0
  %v104 = vadd.f32 0.0, %v103
  %v105 = vpop.f32.mrf.mxu0
  %v106 = vadd.f32 0.0, %v105
  %107 = vdwg.mxu0
  %v108 = vadd.f32 %v20, %v104
  %v109 = vadd.f32 %v21, %v106
  %110 = vst [vmem:[#allocation2] sm:$0xff] %v108
  %111 = vst [vmem:[#allocation2 + $0x8] sm:$0xff] %v109
  // Predicated region
  $region18: #{fc_layer_forward.1} parent=0 // pred_check
    %p112 = pneg %p14
  $region19: #{fc_layer_forward.1} parent=0 // pred_check_branch
    %114 = sbr.rel (%p112) target = $region21
  $region20: #{fc_layer_forward.1} parent=0 // pred_region
    %v115 = vld [vmem:[#allocation2] sm:$0xff]
    %v116 = vld [vmem:[#allocation2 + $0x8] sm:$0xff]
    %v117 = vld [vmem:[%s2] sm:$0x1]
    %v119 = vperm.slane %v117, 0
    %v121 = vadd.f32 %v115, %v119
    %v122 = vadd.f32 %v116, %v119
    %v123 = vmin.f32 %v121, 20.0
    %v124 = vmin.f32 %v122, 20.0
    %v125 = vmul.f32 %v123, 1.442695
    %v126 = vpow.pop %v125
    %v127 = vmul.f32 %v124, 1.442695
    %v128 = vpow.pop %v127
    %v129 = vadd.f32 %v126, 2.0
    %v130 = vadd.f32 %v128, 2.0
    %v131 = vmul.f32 %v126, %v129
    %v132 = vmul.f32 %v128, %v130
    %v133 = vadd.f32 %v131, 2.0
    %v134 = vadd.f32 %v132, 2.0
    %v135 = vrcp.pop %v133
    %v136 = vrcp.pop %v134
    %v137 = vmul.f32 %v131, %v135
    %v138 = vmul.f32 %v132, %v136
    %v139 = vmul.f32 %v121, %v137
    %v140 = vmul.f32 %v122, %v138
    %141 = vst [vmem:[%s3] sm:$0xff] %v139
    %142 = vst [vmem:[%s3 + $0x8] sm:$0xff] %v140
  $region21: #{fc_layer_forward.1} parent=0 // pred_fallthru
    _
  // Predicated region
  $region22: #{fc_layer_forward.1} parent=0 // pred_check
    _
  $region23: #{fc_layer_forward.1} parent=0 // pred_check_branch
    %144 = sbr.rel (0) target = $region25
  $region24: #{fc_layer_forward.1} parent=0 // pred_region
    _
  $region25: #{fc_layer_forward.1} parent=0 // pred_fallthru
    _
  // Predicated region
  $region26: #{fc_layer_forward.1} parent=0 // pred_check
    _
  $region27: #{fc_layer_forward.1} parent=0 // pred_check_branch
    %146 = sbr.rel (0) target = $region29
  $region28: #{fc_layer_forward.1} parent=0 // pred_region
    _
  $region29: #{fc_layer_forward.1} parent=0 // pred_fallthru
    _

</llo_original>
